<compile_context>
chip_gen: v5e
topology: v5e:2x2
jax: 0.10.0
libtpu: 0.0.40
codegen_flags: <defaults>
</compile_context>

<pallas_src>
import jax
import jax.numpy as jnp
from jax.experimental import pallas as pl
from jax.experimental.pallas import tpu as pltpu

LANE = 128  # TPU lane width; gate slots / feature dims are padded to this.


def _round_up(n, m):
    return ((n + m - 1) // m) * m


def prepare_params(w_ih, w_hh, b_ih, b_hh, w_fc, b_fc):
    """One-time parameter prep (do NOT call per step).

    Builds:
      w_gates : (Dp+Hp, 6*Hp) bf16  block-diag of W_ih^T (rows [0:D]) and
                W_hh^T (rows [Dp:Dp+H]); each of the 6 gate slots is padded to
                Hp (a multiple of 128) lanes so in-kernel gate slices are
                lane-aligned.  Column order: gi_r, gi_z, gi_n, gh_r, gh_z, gh_n.
      b_gates : (1, 6*Hp) f32
      w_fc    : (Hp, Dp)  bf16  fc_out weight, transposed + zero padded
      b_fc    : (1, Dp)   f32
    Zero padding guarantees padded lanes stay exactly 0 through the GRU math.
    """
    w_ih = jnp.asarray(w_ih, jnp.float32)   # (3H, D)
    w_hh = jnp.asarray(w_hh, jnp.float32)   # (3H, H)
    b_ih = jnp.asarray(b_ih, jnp.float32)   # (3H,)
    b_hh = jnp.asarray(b_hh, jnp.float32)   # (3H,)
    w_fc = jnp.asarray(w_fc, jnp.float32)   # (D, H)
    b_fc = jnp.asarray(b_fc, jnp.float32)   # (D,)

    D = w_ih.shape[1]
    H = w_hh.shape[1]
    Dp = _round_up(D, LANE)
    Hp = _round_up(H, LANE)

    wih_t = w_ih.T          # (D, 3H), columns ordered (r, z, n)
    whh_t = w_hh.T          # (H, 3H)

    w_gates = jnp.zeros((Dp + Hp, 6 * Hp), jnp.float32)
    b_gates = jnp.zeros((1, 6 * Hp), jnp.float32)
    for g in range(3):
        # x -> gi_g  (rows [0:D], slot g)
        w_gates = w_gates.at[:D, g * Hp:g * Hp + H].set(
            wih_t[:, g * H:(g + 1) * H])
        b_gates = b_gates.at[0, g * Hp:g * Hp + H].set(b_ih[g * H:(g + 1) * H])
        # h -> gh_g  (rows [Dp:Dp+H], slot 3+g)
        w_gates = w_gates.at[Dp:Dp + H, (3 + g) * Hp:(3 + g) * Hp + H].set(
            whh_t[:, g * H:(g + 1) * H])
        b_gates = b_gates.at[0, (3 + g) * Hp:(3 + g) * Hp + H].set(
            b_hh[g * H:(g + 1) * H])

    w_fc_p = jnp.zeros((Hp, Dp), jnp.float32).at[:H, :D].set(w_fc.T)
    b_fc_p = jnp.zeros((1, Dp), jnp.float32).at[0, :D].set(b_fc)

    return dict(
        w_gates=w_gates.astype(jnp.bfloat16),   # MXU operands in bf16
        b_gates=b_gates,                        # bias / elementwise math in f32
        w_fc=w_fc_p.astype(jnp.bfloat16),
        b_fc=b_fc_p,
    )


def _decoder_kernel(x_ref, h0_ref, wg_ref, bg_ref, wfc_ref, bfc_ref,
                    pred_ref, hout_ref, h_scr):
    """One grid step == one decoder timestep; hidden carried in VMEM scratch."""
    Hp = h0_ref.shape[-1]

    @pl.when(pl.program_id(0) == 0)
    def _():
        h_scr[...] = h0_ref[...]

    x = x_ref[0]                       # (B, Dp) f32, padded lanes are 0
    h = h_scr[...]                     # (B, Hp) f32, padded lanes are 0

    # Single fused MXU call for both gate matmuls (bf16 operands, f32 acc).
    xh = jnp.concatenate([x, h], axis=-1).astype(jnp.bfloat16)   # (B, Dp+Hp)
    g = jnp.dot(xh, wg_ref[...], preferred_element_type=jnp.float32) + bg_ref[...]

    # Lane-aligned gate slices (each slot is Hp = multiple of 128 lanes).
    gi_r = g[:, 0 * Hp:1 * Hp]
    gi_z = g[:, 1 * Hp:2 * Hp]
    gi_n = g[:, 2 * Hp:3 * Hp]
    gh_r = g[:, 3 * Hp:4 * Hp]
    gh_z = g[:, 4 * Hp:5 * Hp]
    gh_n = g[:, 5 * Hp:6 * Hp]

    # torch.nn.GRUCell: r, z, n ; n uses r * (W_hh_n h + b_hh_n).  f32 VPU/EUP.
    r = jax.nn.sigmoid(gi_r + gh_r)
    z = jax.nn.sigmoid(gi_z + gh_z)
    n = jnp.tanh(gi_n + r * gh_n)
    h_new = (1.0 - z) * n + z * h      # padded lanes stay exactly 0

    # prediction = input + fc_out(h_new); residual stays in f32.
    pred = x + jnp.dot(h_new.astype(jnp.bfloat16), wfc_ref[...],
                       preferred_element_type=jnp.float32) + bfc_ref[...]

    h_scr[...] = h_new
    hout_ref[...] = h_new.astype(hout_ref.dtype)
    pred_ref[0] = pred.astype(pred_ref.dtype)


def _decode_impl(x_seq, h0, params):
    """Run the Decoder forward for each of the T steps in x_seq inside one
    pipelined Pallas kernel (weights resident in VMEM across all steps)."""
    T, B, D = x_seq.shape
    H = h0.shape[-1]
    Hp, Dp = params["w_fc"].shape       # (Hp, Dp)
    Bp = _round_up(B, 8)

    # Lane-dense, zero-padded activations (padding columns/rows stay 0).
    x_pad = jnp.zeros((T, Bp, Dp), jnp.float32).at[:, :B, :D].set(
        x_seq.astype(jnp.float32))
    h_pad = jnp.zeros((Bp, Hp), jnp.float32).at[:B, :H].set(
        h0.astype(jnp.float32))

    pred_pad, hT_pad = pl.pallas_call(
        _decoder_kernel,
        out_shape=(
            jax.ShapeDtypeStruct((T, Bp, Dp), jnp.float32),
            jax.ShapeDtypeStruct((Bp, Hp), jnp.float32),
        ),
        grid_spec=pltpu.PrefetchScalarGridSpec(
            num_scalar_prefetch=0,
            grid=(T,),
            in_specs=[
                pl.BlockSpec((1, Bp, Dp), lambda t: (t, 0, 0)),            # x_t
                pl.BlockSpec((Bp, Hp), lambda t: (0, 0)),                  # h0 (resident)
                pl.BlockSpec(params["w_gates"].shape, lambda t: (0, 0)),   # resident weights
                pl.BlockSpec(params["b_gates"].shape, lambda t: (0, 0)),
                pl.BlockSpec(params["w_fc"].shape, lambda t: (0, 0)),
                pl.BlockSpec(params["b_fc"].shape, lambda t: (0, 0)),
            ],
            out_specs=[
                pl.BlockSpec((1, Bp, Dp), lambda t: (t, 0, 0)),            # pred_t
                pl.BlockSpec((Bp, Hp), lambda t: (0, 0)),                  # h_T (resident)
            ],
            scratch_shapes=[pltpu.VMEM((Bp, Hp), jnp.float32)],            # hidden carry
        ),
        # Hidden state updated in place (h output reuses h input HBM buffer).
        input_output_aliases={1: 1},
        compiler_params=pltpu.CompilerParams(
            dimension_semantics=("arbitrary",)),   # T carries state -> sequential
    )(x_pad, h_pad, params["w_gates"], params["b_gates"],
      params["w_fc"], params["b_fc"])

    pred = pred_pad[:, :B, :D].astype(x_seq.dtype)
    h_T = hT_pad[:B, :H].astype(h0.dtype)
    return pred, h_T


decoder_decode = jax.jit(_decode_impl)


def decoder_forward(x, h, params):
    """Single-step Decoder.forward(input, hidden) -> (prediction, hidden_new)."""
    pred_seq, h_new = decoder_decode(x[None], h, params)
    return pred_seq[0], h_new


def _ref_forward(x, h, w_ih, w_hh, b_ih, b_hh, w_fc, b_fc):
    """Pure-JAX f32 reference mirroring torch.nn.GRUCell + Linear."""
    gi = x @ w_ih.T + b_ih
    gh = h @ w_hh.T + b_hh
    H = h.shape[-1]
    r = jax.nn.sigmoid(gi[:, :H] + gh[:, :H])
    z = jax.nn.sigmoid(gi[:, H:2 * H] + gh[:, H:2 * H])
    n = jnp.tanh(gi[:, 2 * H:] + r * gh[:, 2 * H:])
    h_new = (1.0 - z) * n + z * h
    pred = x + h_new @ w_fc.T + b_fc
    return pred, h_new


if __name__ == "__main__":
    B, OUTPUT_DIM, HID_DIM, T = 8, 16, 32, 6

    key = jax.random.PRNGKey(0)
    ks = jax.random.split(key, 9)
    bound = float(HID_DIM) ** -0.5

    x = jax.random.normal(ks[0], (B, OUTPUT_DIM), dtype=jnp.float32)
    h0 = jax.random.normal(ks[1], (B, HID_DIM), dtype=jnp.float32)
    x_seq = jax.random.normal(ks[8], (T, B, OUTPUT_DIM), dtype=jnp.float32)

    # PyTorch-style uniform init in [-1/sqrt(H), 1/sqrt(H)].
    w_ih = jax.random.uniform(ks[2], (3 * HID_DIM, OUTPUT_DIM), minval=-bound, maxval=bound)
    w_hh = jax.random.uniform(ks[3], (3 * HID_DIM, HID_DIM), minval=-bound, maxval=bound)
    b_ih = jax.random.uniform(ks[4], (3 * HID_DIM,), minval=-bound, maxval=bound)
    b_hh = jax.random.uniform(ks[5], (3 * HID_DIM,), minval=-bound, maxval=bound)
    w_fc = jax.random.uniform(ks[6], (OUTPUT_DIM, HID_DIM), minval=-bound, maxval=bound)
    b_fc = jax.random.uniform(ks[7], (OUTPUT_DIM,), minval=-bound, maxval=bound)

    # One-time parameter prep (transpose / pad / fuse / bf16 cast).
    params = prepare_params(w_ih, w_hh, b_ih, b_hh, w_fc, b_fc)

    # --- single step: exact Decoder.forward semantics --------------------
    pred, h_new = decoder_forward(x, h0, params)
    jax.block_until_ready((pred, h_new))
    pred_ref, h_ref = _ref_forward(x, h0, w_ih, w_hh, b_ih, b_hh, w_fc, b_fc)
    assert pred.shape == (B, OUTPUT_DIM) and h_new.shape == (B, HID_DIM)
    # bf16 MXU operands -> moderate tolerance vs. the f32 reference.
    assert jnp.allclose(pred, pred_ref, atol=3e-2, rtol=3e-2), \
        float(jnp.max(jnp.abs(pred - pred_ref)))
    assert jnp.allclose(h_new, h_ref, atol=3e-2, rtol=3e-2), \
        float(jnp.max(jnp.abs(h_new - h_ref)))

    # --- T-step decode inside one kernel (weights resident in VMEM) ------
    pred_seq, h_T = decoder_decode(x_seq, h0, params)
    jax.block_until_ready((pred_seq, h_T))
    h_r = h0
    preds_r = []
    for t in range(T):
        p_r, h_r = _ref_forward(x_seq[t], h_r, w_ih, w_hh, b_ih, b_hh, w_fc, b_fc)
        preds_r.append(p_r)
    preds_r = jnp.stack(preds_r)
    assert pred_seq.shape == (T, B, OUTPUT_DIM) and h_T.shape == (B, HID_DIM)
    assert jnp.allclose(pred_seq, preds_r, atol=5e-2, rtol=5e-2), \
        float(jnp.max(jnp.abs(pred_seq - preds_r)))
    assert jnp.allclose(h_T, h_r, atol=5e-2, rtol=5e-2), \
        float(jnp.max(jnp.abs(h_T - h_r)))

    print("KERNEL_OK")
</pallas_src>

<mosaic_0001>
module attributes {stable_mosaic.version = 11 : i64} {
  func.func @_decoder_kernel(%arg0: i32, %arg1: memref<1x8x128xf32, #tpu.memory_space<vmem>>, %arg2: memref<8x128xf32, #tpu.memory_space<vmem>>, %arg3: memref<256x768xbf16, #tpu.memory_space<vmem>>, %arg4: memref<1x768xf32, #tpu.memory_space<vmem>>, %arg5: memref<128x128xbf16, #tpu.memory_space<vmem>>, %arg6: memref<1x128xf32, #tpu.memory_space<vmem>>, %arg7: memref<1x8x128xf32, #tpu.memory_space<vmem>>, %arg8: memref<8x128xf32, #tpu.memory_space<vmem>>, %arg9: memref<8x128xf32, #tpu.memory_space<vmem>>) attributes {dimension_semantics = [#tpu.dimension_semantics<arbitrary>], iteration_bounds = array<i64: 1>, scalar_prefetch = 0 : i64, scratch_operands = 1 : i64, tpu.core_type = #tpu.core_type<tc>, window_params = [{transform_indices = @transform_0, window_bounds = array<i64: 1, 8, 128>}, {pipeline_mode = #tpu.pipeline_mode<synchronous>, transform_indices = @transform_1, window_bounds = array<i64: 8, 128>}, {pipeline_mode = #tpu.pipeline_mode<synchronous>, transform_indices = @transform_2, window_bounds = array<i64: 256, 768>}, {pipeline_mode = #tpu.pipeline_mode<synchronous>, transform_indices = @transform_3, window_bounds = array<i64: 1, 768>}, {pipeline_mode = #tpu.pipeline_mode<synchronous>, transform_indices = @transform_4, window_bounds = array<i64: 128, 128>}, {pipeline_mode = #tpu.pipeline_mode<synchronous>, transform_indices = @transform_5, window_bounds = array<i64: 1, 128>}, {transform_indices = @transform_6, window_bounds = array<i64: 1, 8, 128>}, {pipeline_mode = #tpu.pipeline_mode<synchronous>, transform_indices = @transform_7, window_bounds = array<i64: 8, 128>}]} {
    %c0_i32 = arith.constant 0 : i32
    %0 = arith.cmpi eq, %arg0, %c0_i32 : i32
    %1 = arith.extui %0 : i1 to i32
    %c0_i32_0 = arith.constant 0 : i32
    %2 = arith.cmpi ne, %1, %c0_i32_0 : i32
    scf.if %2 {
      %c0_24 = arith.constant 0 : index
      %c0_25 = arith.constant 0 : index
      %51 = vector.load %arg2[%c0_24, %c0_25] : memref<8x128xf32, #tpu.memory_space<vmem>>, vector<8x128xf32>
      %c0_26 = arith.constant 0 : index
      %c0_27 = arith.constant 0 : index
      %52 = vector.load %arg9[%c0_26, %c0_27] : memref<8x128xf32, #tpu.memory_space<vmem>>, vector<8x128xf32>
      tpu.vector_store %arg9[%c0_26, %c0_27], %51 {strides = array<i32>} : memref<8x128xf32, #tpu.memory_space<vmem>>, vector<8x128xf32>,
    } else {
    }
    %c0 = arith.constant 0 : index
    %c0_1 = arith.constant 0 : index
    %c0_2 = arith.constant 0 : index
    %3 = vector.load %arg1[%c0, %c0_1, %c0_2] : memref<1x8x128xf32, #tpu.memory_space<vmem>>, vector<1x8x128xf32>
    %4 = vector.shape_cast %3 : vector<1x8x128xf32> to vector<8x128xf32>
    %c0_3 = arith.constant 0 : index
    %c0_4 = arith.constant 0 : index
    %5 = vector.load %arg9[%c0_3, %c0_4] : memref<8x128xf32, #tpu.memory_space<vmem>>, vector<8x128xf32>
    %6 = tpu.concatenate %4, %5 in 1 : vector<8x128xf32>, vector<8x128xf32> -> vector<8x256xf32>
    %7 = arith.truncf %6 : vector<8x256xf32> to vector<8x256xbf16>
    %c0_5 = arith.constant 0 : index
    %c0_6 = arith.constant 0 : index
    %8 = vector.load %arg3[%c0_5, %c0_6] : memref<256x768xbf16, #tpu.memory_space<vmem>>, vector<256x768xbf16>
    %cst = arith.constant dense<0.000000e+00> : vector<8x768xf32>
    %9 = tpu.matmul %7, %8, %cst {dimension_numbers = #tpu.dot_dimension_numbers<[1], [0], [0], [1], [0, 0, 1, 1], [], []>} : vector<8x256xbf16>, vector<256x768xbf16>, vector<8x768xf32> -> vector<8x768xf32>
    %c0_7 = arith.constant 0 : index
    %c0_8 = arith.constant 0 : index
    %10 = vector.load %arg4[%c0_7, %c0_8] : memref<1x768xf32, #tpu.memory_space<vmem>>, vector<1x768xf32>
    %11 = vector.broadcast %10 : vector<1x768xf32> to vector<8x768xf32>
    %12 = arith.addf %9, %11 : vector<8x768xf32>
    %13 = vector.extract_strided_slice %12 {offsets = [0, 0], sizes = [8, 128], strides = [1, 1]} : vector<8x768xf32> to vector<8x128xf32>
    %14 = vector.extract_strided_slice %12 {offsets = [0, 128], sizes = [8, 128], strides = [1, 1]} : vector<8x768xf32> to vector<8x128xf32>
    %15 = vector.extract_strided_slice %12 {offsets = [0, 256], sizes = [8, 128], strides = [1, 1]} : vector<8x768xf32> to vector<8x128xf32>
    %16 = vector.extract_strided_slice %12 {offsets = [0, 384], sizes = [8, 128], strides = [1, 1]} : vector<8x768xf32> to vector<8x128xf32>
    %17 = vector.extract_strided_slice %12 {offsets = [0, 512], sizes = [8, 128], strides = [1, 1]} : vector<8x768xf32> to vector<8x128xf32>
    %18 = vector.extract_strided_slice %12 {offsets = [0, 640], sizes = [8, 128], strides = [1, 1]} : vector<8x768xf32> to vector<8x128xf32>
    %19 = arith.addf %13, %16 : vector<8x128xf32>
    %20 = arith.negf %19 : vector<8x128xf32>
    %21 = math.exp %20 : vector<8x128xf32>
    %cst_9 = arith.constant 1.000000e+00 : f32
    %22 = vector.broadcast %cst_9 : f32 to vector<8x128xf32>
    %23 = arith.addf %22, %21 : vector<8x128xf32>
    %24 = arith.divf %22, %23 : vector<8x128xf32>
    %25 = arith.addf %14, %17 : vector<8x128xf32>
    %26 = arith.negf %25 : vector<8x128xf32>
    %27 = math.exp %26 : vector<8x128xf32>
    %cst_10 = arith.constant 1.000000e+00 : f32
    %28 = vector.broadcast %cst_10 : f32 to vector<8x128xf32>
    %29 = arith.addf %28, %27 : vector<8x128xf32>
    %30 = arith.divf %28, %29 : vector<8x128xf32>
    %31 = arith.mulf %24, %18 : vector<8x128xf32>
    %32 = arith.addf %15, %31 : vector<8x128xf32>
    %33 = math.tanh %32 : vector<8x128xf32>
    %cst_11 = arith.constant 1.000000e+00 : f32
    %34 = vector.broadcast %cst_11 : f32 to vector<8x128xf32>
    %35 = arith.subf %34, %30 : vector<8x128xf32>
    %36 = arith.mulf %35, %33 : vector<8x128xf32>
    %37 = arith.mulf %30, %5 : vector<8x128xf32>
    %38 = arith.addf %36, %37 : vector<8x128xf32>
    %39 = arith.truncf %38 : vector<8x128xf32> to vector<8x128xbf16>
    %c0_12 = arith.constant 0 : index
    %c0_13 = arith.constant 0 : index
    %40 = vector.load %arg5[%c0_12, %c0_13] : memref<128x128xbf16, #tpu.memory_space<vmem>>, vector<128x128xbf16>
    %cst_14 = arith.constant dense<0.000000e+00> : vector<8x128xf32>
    %41 = tpu.matmul %39, %40, %cst_14 {dimension_numbers = #tpu.dot_dimension_numbers<[1], [0], [0], [1], [0, 0, 1, 1], [], []>} : vector<8x128xbf16>, vector<128x128xbf16>, vector<8x128xf32> -> vector<8x128xf32>
    %42 = arith.addf %4, %41 : vector<8x128xf32>
    %c0_15 = arith.constant 0 : index
    %c0_16 = arith.constant 0 : index
    %43 = vector.load %arg6[%c0_15, %c0_16] : memref<1x128xf32, #tpu.memory_space<vmem>>, vector<1x128xf32>
    %44 = vector.broadcast %43 : vector<1x128xf32> to vector<8x128xf32>
    %45 = arith.addf %42, %44 : vector<8x128xf32>
    %c0_17 = arith.constant 0 : index
    %c0_18 = arith.constant 0 : index
    %46 = vector.load %arg9[%c0_17, %c0_18] : memref<8x128xf32, #tpu.memory_space<vmem>>, vector<8x128xf32>
    tpu.vector_store %arg9[%c0_17, %c0_18], %38 {strides = array<i32>} : memref<8x128xf32, #tpu.memory_space<vmem>>, vector<8x128xf32>,
    %c0_19 = arith.constant 0 : index
    %c0_20 = arith.constant 0 : index
    %47 = vector.load %arg8[%c0_19, %c0_20] : memref<8x128xf32, #tpu.memory_space<vmem>>, vector<8x128xf32>
    tpu.vector_store %arg8[%c0_19, %c0_20], %38 {strides = array<i32>} : memref<8x128xf32, #tpu.memory_space<vmem>>, vector<8x128xf32>,
    %c0_21 = arith.constant 0 : index
    %c0_22 = arith.constant 0 : index
    %c0_23 = arith.constant 0 : index
    %48 = vector.load %arg7[%c0_21, %c0_22, %c0_23] : memref<1x8x128xf32, #tpu.memory_space<vmem>>, vector<1x8x128xf32>
    %49 = vector.shape_cast %48 : vector<1x8x128xf32> to vector<8x128xf32>
    %50 = vector.shape_cast %45 : vector<8x128xf32> to vector<1x8x128xf32>
    tpu.vector_store %arg7[%c0_21, %c0_22, %c0_23], %50 {strides = array<i32>} : memref<1x8x128xf32, #tpu.memory_space<vmem>>, vector<1x8x128xf32>,
    return
  }
  func.func @transform_0(%arg0: i32) -> (i32, i32, i32) {
    %c0_i32 = arith.constant 0 : i32
    %c0_i32_0 = arith.constant 0 : i32
    %c0_i32_1 = arith.constant 0 : i32
    return %arg0, %c0_i32, %c0_i32_0 : i32, i32, i32
  }
  func.func @transform_1(%arg0: i32) -> (i32, i32) {
    %c0_i32 = arith.constant 0 : i32
    %c0_i32_0 = arith.constant 0 : i32
    %c0_i32_1 = arith.constant 0 : i32
    return %c0_i32, %c0_i32_0 : i32, i32
  }
  func.func @transform_2(%arg0: i32) -> (i32, i32) {
    %c0_i32 = arith.constant 0 : i32
    %c0_i32_0 = arith.constant 0 : i32
    %c0_i32_1 = arith.constant 0 : i32
    return %c0_i32, %c0_i32_0 : i32, i32
  }
  func.func @transform_3(%arg0: i32) -> (i32, i32) {
    %c0_i32 = arith.constant 0 : i32
    %c0_i32_0 = arith.constant 0 : i32
    %c0_i32_1 = arith.constant 0 : i32
    return %c0_i32, %c0_i32_0 : i32, i32
  }
  func.func @transform_4(%arg0: i32) -> (i32, i32) {
    %c0_i32 = arith.constant 0 : i32
    %c0_i32_0 = arith.constant 0 : i32
    %c0_i32_1 = arith.constant 0 : i32
    return %c0_i32, %c0_i32_0 : i32, i32
  }
  func.func @transform_5(%arg0: i32) -> (i32, i32) {
    %c0_i32 = arith.constant 0 : i32
    %c0_i32_0 = arith.constant 0 : i32
    %c0_i32_1 = arith.constant 0 : i32
    return %c0_i32, %c0_i32_0 : i32, i32
  }
  func.func @transform_6(%arg0: i32) -> (i32, i32, i32) {
    %c0_i32 = arith.constant 0 : i32
    %c0_i32_0 = arith.constant 0 : i32
    %c0_i32_1 = arith.constant 0 : i32
    return %arg0, %c0_i32, %c0_i32_0 : i32, i32, i32
  }
  func.func @transform_7(%arg0: i32) -> (i32, i32) {
    %c0_i32 = arith.constant 0 : i32
    %c0_i32_0 = arith.constant 0 : i32
    %c0_i32_1 = arith.constant 0 : i32
    return %c0_i32, %c0_i32_0 : i32, i32
  }
}

</mosaic_0001>

<llo_original>
// kernel: _decode_impl.1
$region0: #{_decode_impl.1}
  #allocation0 [shape = 'u32[]', space=smem, size = 0x4, offset = 0x4, fixed_abs, tag = 'smem constant byte address 0x4 - core index']
  #allocation1 [shape = 'u32[72,128]{1,0:T(1,128)}', space=vmem, size = 0x9000, scoped, tag = 'internal scratch']
  #allocation2 [shape = 'f32[8,128]{1,0:T(8,128)}', space=vmem, size = 0x1000, scoped, tag = 'scratch operand']
  %s0 = inlined_call_operand.vmem [shape: f32[1,8,128], index: 0, kind: input, shape index: {}]
  %s1 = inlined_call_operand.vmem [shape: f32[8,128], index: 1, kind: input, shape index: {}, may-alias: {1,7}]
  %s2 = inlined_call_operand.hbm [shape: bf16[256,768], index: 2, kind: input, shape index: {}]
  %s3 = inlined_call_operand.vmem [shape: f32[1,768], index: 3, kind: input, shape index: {}]
  %s4 = inlined_call_operand.hbm [shape: bf16[128,128], index: 4, kind: input, shape index: {}]
  %s5 = inlined_call_operand.vmem [shape: f32[1,128], index: 5, kind: input, shape index: {}]
  %s6 = inlined_call_operand.hbm [shape: f32[1,8,128], index: 6, kind: output, shape index: {0}]
  %s7 = inlined_call_operand.vmem [shape: f32[8,128], index: 7, kind: output, shape index: {1}, may-alias: {1,7}]
  %8 = xla_tuple %s6, %s7
  %s9 = sld [smem:[#allocation0]]
  $region54: #{_decode_impl.1} parent=0
    _
  %s11 = ssub.s32 1, %s9
  %s12 = scalar_select 0, %s11, %s9
  $region1: #{_decode_impl.1} parent=0
    #allocation3 [shape = 'u8[393216]{0}', space=vmem, size = 0x60000, scoped, tag = 'input window, operand 2, single buffered']
    #allocation4 [shape = 's32[1]{0}', space=sflag, size = 0x4, scoped, tag = 'scoped memory for _decode_impl.1']
    #allocation5 [shape = 's32[1]{0}', space=sflag, size = 0x4, scoped, tag = 'scoped memory for _decode_impl.1']
    #allocation6 [shape = 'u8[32768]{0}', space=vmem, size = 0x8000, scoped, tag = 'input window, operand 4, single buffered']
    #allocation7 [shape = 's32[1]{0}', space=sflag, size = 0x4, scoped, tag = 'scoped memory for _decode_impl.1']
    #allocation8 [shape = 'u8[4096]{0}', space=vmem, size = 0x1000, scoped, tag = 'output window, operand 0, single buffered']
    %13 = vsyncpa [#allocation4], 0
    %14 = vsyncpa [#allocation7], 0
    %15 = vsyncpa [#allocation5], 0
    // Predicated region
    $region2: #{_decode_impl.1} parent=1 // pred_check
      _
    $region3: #{_decode_impl.1} parent=1 // pred_check_branch
      %17 = sbr.rel (0) target = $region5
    $region4: #{_decode_impl.1} parent=1 // pred_region
      _
    $region5: #{_decode_impl.1} parent=1 // pred_fallthru
      _
    // Predicated region
    $region6: #{_decode_impl.1} parent=1 // pred_check
      _
    $region7: #{_decode_impl.1} parent=1 // pred_check_branch
      %19 = sbr.rel (0) target = $region9
    $region8: #{_decode_impl.1} parent=1 // pred_region
      _
    $region9: #{_decode_impl.1} parent=1 // pred_fallthru
      _
    // Predicated region
    $region10: #{_decode_impl.1} parent=1 // pred_check
      _
    $region11: #{_decode_impl.1} parent=1 // pred_check_branch
      %21 = sbr.rel (0) target = $region13
    $region12: #{_decode_impl.1} parent=1 // pred_region
      %23 = vsyncadd [#allocation4], 0
      %s24 = sshll.u32 %s2, 4
      %s25 = int_to_ptr.hbm [resolvable:$true] %s24
      %s26 = sshll.u32 [#allocation3], 4
      %s27 = int_to_ptr.vmem [resolvable:$true] %s26
      %32 = dma.hbm_to_vmem [thread:$0]  %s25, 12288, %s27, [#allocation4], 384, 384, 24
    $region13: #{_decode_impl.1} parent=1 // pred_fallthru
      _
    // Predicated region
    $region14: #{_decode_impl.1} parent=1 // pred_check
      _
    $region15: #{_decode_impl.1} parent=1 // pred_check_branch
      %34 = sbr.rel (0) target = $region17
    $region16: #{_decode_impl.1} parent=1 // pred_region
      _
    $region17: #{_decode_impl.1} parent=1 // pred_fallthru
      _
    // Predicated region
    $region18: #{_decode_impl.1} parent=1 // pred_check
      _
    $region19: #{_decode_impl.1} parent=1 // pred_check_branch
      %36 = sbr.rel (0) target = $region21
    $region20: #{_decode_impl.1} parent=1 // pred_region
      %38 = vsyncadd [#allocation7], 0
      %s39 = sshll.u32 %s4, 4
      %s40 = int_to_ptr.hbm [resolvable:$true] %s39
      %s41 = sshll.u32 [#allocation6], 4
      %s42 = int_to_ptr.vmem [resolvable:$true] %s41
      %47 = dma.hbm_to_vmem [thread:$0]  %s40, 1024, %s42, [#allocation7], 64, 64, 4
    $region21: #{_decode_impl.1} parent=1 // pred_fallthru
      _
    // Predicated region
    $region22: #{_decode_impl.1} parent=1 // pred_check
      _
    $region23: #{_decode_impl.1} parent=1 // pred_check_branch
      %49 = sbr.rel (0) target = $region25
    $region24: #{_decode_impl.1} parent=1 // pred_region
      _
    $region25: #{_decode_impl.1} parent=1 // pred_fallthru
      _
    // Predicated region
    $region26: #{_decode_impl.1} parent=1 // pred_check
      _
    $region27: #{_decode_impl.1} parent=1 // pred_check_branch
      %51 = sbr.rel (0) target = $region29
    $region28: #{_decode_impl.1} parent=1 // pred_region
      %53 = dma.done [#allocation4], 12288
    $region29: #{_decode_impl.1} parent=1 // pred_fallthru
      _
    // Predicated region
    $region30: #{_decode_impl.1} parent=1 // pred_check
      _
    $region31: #{_decode_impl.1} parent=1 // pred_check_branch
      %55 = sbr.rel (0) target = $region33
    $region32: #{_decode_impl.1} parent=1 // pred_region
      %57 = dma.done [#allocation7], 1024
    $region33: #{_decode_impl.1} parent=1 // pred_fallthru
      _
    %p58 = scmp.eq.s32.totalorder 0, 0
    // Predicated region
    $region34: #{_decode_impl.1} parent=1 // pred_check
      %p59 = pneg %p58
    $region35: #{_decode_impl.1} parent=1 // pred_check_branch
      %61 = sbr.rel (%p59) target = $region37
    $region36: #{_decode_impl.1} parent=1 // pred_region
      %v62 = vld [vmem:[%s1] sm:$0xff]
      %63 = vst [vmem:[#allocation2] sm:$0xff] %v62
    $region37: #{_decode_impl.1} parent=1 // pred_fallthru
      _
    %v64 = vld [vmem:[%s0] sm:$0xff]
    %v65 = vld [vmem:[#allocation2] sm:$0xff]
    %v66 = vpack.c.bf16 %v64, %v64
    %v67 = vpack.c.bf16 %v65, %v65
    %v68 = vld [vmem:[#allocation3] sm:$0xff]
    %v69 = vld [vmem:[#allocation3 + $0x8] sm:$0xff]
    %v70 = vld [vmem:[#allocation3 + $0x10] sm:$0xff]
    %v71 = vld [vmem:[#allocation3 + $0x18] sm:$0xff]
    %v72 = vld [vmem:[#allocation3 + $0x20] sm:$0xff]
    %v73 = vld [vmem:[#allocation3 + $0x28] sm:$0xff]
    %v74 = vld [vmem:[#allocation3 + $0x30] sm:$0xff]
    %v75 = vld [vmem:[#allocation3 + $0x38] sm:$0xff]
    %v76 = vld [vmem:[#allocation3 + $0x40] sm:$0xff]
    %v77 = vld [vmem:[#allocation3 + $0x48] sm:$0xff]
    %v78 = vld [vmem:[#allocation3 + $0x50] sm:$0xff]
    %v79 = vld [vmem:[#allocation3 + $0x58] sm:$0xff]
    %v80 = vld [vmem:[#allocation3 + $0x60] sm:$0xff]
    %v81 = vld [vmem:[#allocation3 + $0x68] sm:$0xff]
    %v82 = vld [vmem:[#allocation3 + $0x70] sm:$0xff]
    %v83 = vld [vmem:[#allocation3 + $0x78] sm:$0xff]
    %v84 = vld [vmem:[#allocation3 + $0x80] sm:$0xff]
    %v85 = vld [vmem:[#allocation3 + $0x88] sm:$0xff]
    %v86 = vld [vmem:[#allocation3 + $0x90] sm:$0xff]
    %v87 = vld [vmem:[#allocation3 + $0x98] sm:$0xff]
    %v88 = vld [vmem:[#allocation3 + $0xa0] sm:$0xff]
    %v89 = vld [vmem:[#allocation3 + $0xa8] sm:$0xff]
    %v90 = vld [vmem:[#allocation3 + $0xb0] sm:$0xff]
    %v91 = vld [vmem:[#allocation3 + $0xb8] sm:$0xff]
    %v92 = vld [vmem:[#allocation3 + $0xc0] sm:$0xff]
    %v93 = vld [vmem:[#allocation3 + $0xc8] sm:$0xff]
    %v94 = vld [vmem:[#allocation3 + $0xd0] sm:$0xff]
    %v95 = vld [vmem:[#allocation3 + $0xd8] sm:$0xff]
    %v96 = vld [vmem:[#allocation3 + $0xe0] sm:$0xff]
    %v97 = vld [vmem:[#allocation3 + $0xe8] sm:$0xff]
    %v98 = vld [vmem:[#allocation3 + $0xf0] sm:$0xff]
    %v99 = vld [vmem:[#allocation3 + $0xf8] sm:$0xff]
    %v100 = vld [vmem:[#allocation3 + $0x100] sm:$0xff]
    %v101 = vld [vmem:[#allocation3 + $0x108] sm:$0xff]
    %v102 = vld [vmem:[#allocation3 + $0x110] sm:$0xff]
    %v103 = vld [vmem:[#allocation3 + $0x118] sm:$0xff]
    %v104 = vld [vmem:[#allocation3 + $0x120] sm:$0xff]
    %v105 = vld [vmem:[#allocation3 + $0x128] sm:$0xff]
    %v106 = vld [vmem:[#allocation3 + $0x130] sm:$0xff]
    %v107 = vld [vmem:[#allocation3 + $0x138] sm:$0xff]
    %v108 = vld [vmem:[#allocation3 + $0x140] sm:$0xff]
    %v109 = vld [vmem:[#allocation3 + $0x148] sm:$0xff]
    %v110 = vld [vmem:[#allocation3 + $0x150] sm:$0xff]
    %v111 = vld [vmem:[#allocation3 + $0x158] sm:$0xff]
    %v112 = vld [vmem:[#allocation3 + $0x160] sm:$0xff]
    %v113 = vld [vmem:[#allocation3 + $0x168] sm:$0xff]
    %v114 = vld [vmem:[#allocation3 + $0x170] sm:$0xff]
    %v115 = vld [vmem:[#allocation3 + $0x178] sm:$0xff]
    %v116 = vld [vmem:[#allocation3 + $0x180] sm:$0xff]
    %v117 = vld [vmem:[#allocation3 + $0x188] sm:$0xff]
    %v118 = vld [vmem:[#allocation3 + $0x190] sm:$0xff]
    %v119 = vld [vmem:[#allocation3 + $0x198] sm:$0xff]
    %v120 = vld [vmem:[#allocation3 + $0x1a0] sm:$0xff]
    %v121 = vld [vmem:[#allocation3 + $0x1a8] sm:$0xff]
    %v122 = vld [vmem:[#allocation3 + $0x1b0] sm:$0xff]
    %v123 = vld [vmem:[#allocation3 + $0x1b8] sm:$0xff]
    %v124 = vld [vmem:[#allocation3 + $0x1c0] sm:$0xff]
    %v125 = vld [vmem:[#allocation3 + $0x1c8] sm:$0xff]
    %v126 = vld [vmem:[#allocation3 + $0x1d0] sm:$0xff]
    %v127 = vld [vmem:[#allocation3 + $0x1d8] sm:$0xff]
    %v128 = vld [vmem:[#allocation3 + $0x1e0] sm:$0xff]
    %v129 = vld [vmem:[#allocation3 + $0x1e8] sm:$0xff]
    %v130 = vld [vmem:[#allocation3 + $0x1f0] sm:$0xff]
    %v131 = vld [vmem:[#allocation3 + $0x1f8] sm:$0xff]
    %v132 = vld [vmem:[#allocation3 + $0x200] sm:$0xff]
    %v133 = vld [vmem:[#allocation3 + $0x208] sm:$0xff]
    %v134 = vld [vmem:[#allocation3 + $0x210] sm:$0xff]
    %v135 = vld [vmem:[#allocation3 + $0x218] sm:$0xff]
    %v136 = vld [vmem:[#allocation3 + $0x220] sm:$0xff]
    %v137 = vld [vmem:[#allocation3 + $0x228] sm:$0xff]
    %v138 = vld [vmem:[#allocation3 + $0x230] sm:$0xff]
    %v139 = vld [vmem:[#allocation3 + $0x238] sm:$0xff]
    %v140 = vld [vmem:[#allocation3 + $0x240] sm:$0xff]
    %v141 = vld [vmem:[#allocation3 + $0x248] sm:$0xff]
    %v142 = vld [vmem:[#allocation3 + $0x250] sm:$0xff]
    %v143 = vld [vmem:[#allocation3 + $0x258] sm:$0xff]
    %v144 = vld [vmem:[#allocation3 + $0x260] sm:$0xff]
    %v145 = vld [vmem:[#allocation3 + $0x268] sm:$0xff]
    %v146 = vld [vmem:[#allocation3 + $0x270] sm:$0xff]
    %v147 = vld [vmem:[#allocation3 + $0x278] sm:$0xff]
    %v148 = vld [vmem:[#allocation3 + $0x280] sm:$0xff]
    %v149 = vld [vmem:[#allocation3 + $0x288] sm:$0xff]
    %v150 = vld [vmem:[#allocation3 + $0x290] sm:$0xff]
    %v151 = vld [vmem:[#allocation3 + $0x298] sm:$0xff]
    %v152 = vld [vmem:[#allocation3 + $0x2a0] sm:$0xff]
    %v153 = vld [vmem:[#allocation3 + $0x2a8] sm:$0xff]
    %v154 = vld [vmem:[#allocation3 + $0x2b0] sm:$0xff]
    %v155 = vld [vmem:[#allocation3 + $0x2b8] sm:$0xff]
    %v156 = vld [vmem:[#allocation3 + $0x2c0] sm:$0xff]
    %v157 = vld [vmem:[#allocation3 + $0x2c8] sm:$0xff]
    %v158 = vld [vmem:[#allocation3 + $0x2d0] sm:$0xff]
    %v159 = vld [vmem:[#allocation3 + $0x2d8] sm:$0xff]
    %v160 = vld [vmem:[#allocation3 + $0x2e0] sm:$0xff]
    %v161 = vld [vmem:[#allocation3 + $0x2e8] sm:$0xff]
    %v162 = vld [vmem:[#allocation3 + $0x2f0] sm:$0xff]
    %v163 = vld [vmem:[#allocation3 + $0x2f8] sm:$0xff]
    %v164 = vld [vmem:[%s3] sm:$0x3f]
    %v166 = vperm.slane %v164, 0
    %v167 = vperm.slane %v164, 1
    %v168 = vperm.slane %v164, 2
    %v169 = vperm.slane %v164, 3
    %v170 = vperm.slane %v164, 4
    %v171 = vperm.slane %v164, 5
    %v274 = vunpack.c.l.b16 %v68
    %v275 = vunpack.c.h.b16 %v68
    %v276 = vunpack.c.l.b16 %v69
    %v277 = vunpack.c.h.b16 %v69
    %v278 = vunpack.c.l.b16 %v70
    %v279 = vunpack.c.h.b16 %v70
    %v280 = vunpack.c.l.b16 %v71
    %v281 = vunpack.c.h.b16 %v71
    %v282 = vunpack.c.l.b16 %v72
    %v283 = vunpack.c.h.b16 %v72
    %v284 = vunpack.c.l.b16 %v73
    %v285 = vunpack.c.h.b16 %v73
    %v286 = vunpack.c.l.b16 %v74
    %v287 = vunpack.c.h.b16 %v74
    %v288 = vunpack.c.l.b16 %v75
    %v289 = vunpack.c.h.b16 %v75
    %v290 = vunpack.c.l.b16 %v76
    %v291 = vunpack.c.h.b16 %v76
    %v292 = vunpack.c.l.b16 %v77
    %v293 = vunpack.c.h.b16 %v77
    %v294 = vunpack.c.l.b16 %v78
    %v295 = vunpack.c.h.b16 %v78
    %v296 = vunpack.c.l.b16 %v79
    %v297 = vunpack.c.h.b16 %v79
    %v298 = vunpack.c.l.b16 %v80
    %v299 = vunpack.c.h.b16 %v80
    %v300 = vunpack.c.l.b16 %v81
    %v301 = vunpack.c.h.b16 %v81
    %v302 = vunpack.c.l.b16 %v82
    %v303 = vunpack.c.h.b16 %v82
    %v304 = vunpack.c.l.b16 %v83
    %v305 = vunpack.c.h.b16 %v83
    %v306 = vunpack.c.l.b16 %v84
    %v307 = vunpack.c.h.b16 %v84
    %v308 = vunpack.c.l.b16 %v85
    %v309 = vunpack.c.h.b16 %v85
    %v310 = vunpack.c.l.b16 %v86
    %v311 = vunpack.c.h.b16 %v86
    %v312 = vunpack.c.l.b16 %v87
    %v313 = vunpack.c.h.b16 %v87
    %v314 = vunpack.c.l.b16 %v88
    %v315 = vunpack.c.h.b16 %v88
    %v316 = vunpack.c.l.b16 %v89
    %v317 = vunpack.c.h.b16 %v89
    %v318 = vunpack.c.l.b16 %v90
    %v319 = vunpack.c.h.b16 %v90
    %v320 = vunpack.c.l.b16 %v91
    %v321 = vunpack.c.h.b16 %v91
    %v322 = vunpack.c.l.b16 %v92
    %v323 = vunpack.c.h.b16 %v92
    %v324 = vunpack.c.l.b16 %v93
    %v325 = vunpack.c.h.b16 %v93
    %v326 = vunpack.c.l.b16 %v94
    %v327 = vunpack.c.h.b16 %v94
    %v328 = vunpack.c.l.b16 %v95
    %v329 = vunpack.c.h.b16 %v95
    %v330 = vunpack.c.l.b16 %v96
    %v331 = vunpack.c.h.b16 %v96
    %v332 = vunpack.c.l.b16 %v97
    %v333 = vunpack.c.h.b16 %v97
    %v334 = vunpack.c.l.b16 %v98
    %v335 = vunpack.c.h.b16 %v98
    %v336 = vunpack.c.l.b16 %v99
    %v337 = vunpack.c.h.b16 %v99
    %v338 = vunpack.c.l.b16 %v100
    %v339 = vunpack.c.h.b16 %v100
    %v340 = vunpack.c.l.b16 %v101
    %v341 = vunpack.c.h.b16 %v101
    %v342 = vunpack.c.l.b16 %v102
    %v343 = vunpack.c.h.b16 %v102
    %v344 = vunpack.c.l.b16 %v103
    %v345 = vunpack.c.h.b16 %v103
    %v346 = vunpack.c.l.b16 %v104
    %v347 = vunpack.c.h.b16 %v104
    %v348 = vunpack.c.l.b16 %v105
    %v349 = vunpack.c.h.b16 %v105
    %v350 = vunpack.c.l.b16 %v106
    %v351 = vunpack.c.h.b16 %v106
    %v352 = vunpack.c.l.b16 %v107
    %v353 = vunpack.c.h.b16 %v107
    %v354 = vunpack.c.l.b16 %v108
    %v355 = vunpack.c.h.b16 %v108
    %v356 = vunpack.c.l.b16 %v109
    %v357 = vunpack.c.h.b16 %v109
    %v358 = vunpack.c.l.b16 %v110
    %v359 = vunpack.c.h.b16 %v110
    %v360 = vunpack.c.l.b16 %v111
    %v361 = vunpack.c.h.b16 %v111
    %v362 = vunpack.c.l.b16 %v112
    %v363 = vunpack.c.h.b16 %v112
    %v364 = vunpack.c.l.b16 %v113
    %v365 = vunpack.c.h.b16 %v113
    %v366 = vunpack.c.l.b16 %v114
    %v367 = vunpack.c.h.b16 %v114
    %v368 = vunpack.c.l.b16 %v115
    %v369 = vunpack.c.h.b16 %v115
    %v370 = vunpack.c.l.b16 %v116
    %v371 = vunpack.c.h.b16 %v116
    %v372 = vunpack.c.l.b16 %v117
    %v373 = vunpack.c.h.b16 %v117
    %v374 = vunpack.c.l.b16 %v118
    %v375 = vunpack.c.h.b16 %v118
    %v376 = vunpack.c.l.b16 %v119
    %v377 = vunpack.c.h.b16 %v119
    %v378 = vunpack.c.l.b16 %v120
    %v379 = vunpack.c.h.b16 %v120
    %v380 = vunpack.c.l.b16 %v121
    %v381 = vunpack.c.h.b16 %v121
    %v382 = vunpack.c.l.b16 %v122
    %v383 = vunpack.c.h.b16 %v122
    %v384 = vunpack.c.l.b16 %v123
    %v385 = vunpack.c.h.b16 %v123
    %v386 = vunpack.c.l.b16 %v124
    %v387 = vunpack.c.h.b16 %v124
    %v388 = vunpack.c.l.b16 %v125
    %v389 = vunpack.c.h.b16 %v125
    %v390 = vunpack.c.l.b16 %v126
    %v391 = vunpack.c.h.b16 %v126
    %v392 = vunpack.c.l.b16 %v127
    %v393 = vunpack.c.h.b16 %v127
    %v394 = vunpack.c.l.b16 %v128
    %v395 = vunpack.c.h.b16 %v128
    %v396 = vunpack.c.l.b16 %v129
    %v397 = vunpack.c.h.b16 %v129
    %v398 = vunpack.c.l.b16 %v130
    %v399 = vunpack.c.h.b16 %v130
    %v400 = vunpack.c.l.b16 %v131
    %v401 = vunpack.c.h.b16 %v131
    %v402 = vunpack.c.l.b16 %v132
    %v403 = vunpack.c.h.b16 %v132
    %v404 = vunpack.c.l.b16 %v133
    %v405 = vunpack.c.h.b16 %v133
    %v406 = vunpack.c.l.b16 %v134
    %v407 = vunpack.c.h.b16 %v134
    %v408 = vunpack.c.l.b16 %v135
    %v409 = vunpack.c.h.b16 %v135
    %v410 = vunpack.c.l.b16 %v136
    %v411 = vunpack.c.h.b16 %v136
    %v412 = vunpack.c.l.b16 %v137
    %v413 = vunpack.c.h.b16 %v137
    %v414 = vunpack.c.l.b16 %v138
    %v415 = vunpack.c.h.b16 %v138
    %v416 = vunpack.c.l.b16 %v139
    %v417 = vunpack.c.h.b16 %v139
    %v418 = vunpack.c.l.b16 %v140
    %v419 = vunpack.c.h.b16 %v140
    %v420 = vunpack.c.l.b16 %v141
    %v421 = vunpack.c.h.b16 %v141
    %v422 = vunpack.c.l.b16 %v142
    %v423 = vunpack.c.h.b16 %v142
    %v424 = vunpack.c.l.b16 %v143
    %v425 = vunpack.c.h.b16 %v143
    %v426 = vunpack.c.l.b16 %v144
    %v427 = vunpack.c.h.b16 %v144
    %v428 = vunpack.c.l.b16 %v145
    %v429 = vunpack.c.h.b16 %v145
    %v430 = vunpack.c.l.b16 %v146
    %v431 = vunpack.c.h.b16 %v146
    %v432 = vunpack.c.l.b16 %v147
    %v433 = vunpack.c.h.b16 %v147
    %v434 = vunpack.c.l.b16 %v148
    %v435 = vunpack.c.h.b16 %v148
    %v436 = vunpack.c.l.b16 %v149
    %v437 = vunpack.c.h.b16 %v149
    %v438 = vunpack.c.l.b16 %v150
    %v439 = vunpack.c.h.b16 %v150
    %v440 = vunpack.c.l.b16 %v151
    %v441 = vunpack.c.h.b16 %v151
    %v442 = vunpack.c.l.b16 %v152
    %v443 = vunpack.c.h.b16 %v152
    %v444 = vunpack.c.l.b16 %v153
    %v445 = vunpack.c.h.b16 %v153
    %v446 = vunpack.c.l.b16 %v154
    %v447 = vunpack.c.h.b16 %v154
    %v448 = vunpack.c.l.b16 %v155
    %v449 = vunpack.c.h.b16 %v155
    %v450 = vunpack.c.l.b16 %v156
    %v451 = vunpack.c.h.b16 %v156
    %v452 = vunpack.c.l.b16 %v157
    %v453 = vunpack.c.h.b16 %v157
    %v454 = vunpack.c.l.b16 %v158
    %v455 = vunpack.c.h.b16 %v158
    %v456 = vunpack.c.l.b16 %v159
    %v457 = vunpack.c.h.b16 %v159
    %v458 = vunpack.c.l.b16 %v160
    %v459 = vunpack.c.h.b16 %v160
    %v460 = vunpack.c.l.b16 %v161
    %v461 = vunpack.c.h.b16 %v161
    %v462 = vunpack.c.l.b16 %v162
    %v463 = vunpack.c.h.b16 %v162
    %v464 = vunpack.c.l.b16 %v163
    %v465 = vunpack.c.h.b16 %v163
    %v466 = vpack.c.b16 %v280, %v274
    %v467 = vpack.c.b16 %v281, %v275
    %v468 = vpack.c.b16 %v282, %v276
    %v469 = vpack.c.b16 %v283, %v277
    %v470 = vpack.c.b16 %v284, %v278
    %v471 = vpack.c.b16 %v285, %v279
    %v472 = vpack.c.b16 %v292, %v286
    %v473 = vpack.c.b16 %v293, %v287
    %v474 = vpack.c.b16 %v294, %v288
    %v475 = vpack.c.b16 %v295, %v289
    %v476 = vpack.c.b16 %v296, %v290
    %v477 = vpack.c.b16 %v297, %v291
    %v478 = vpack.c.b16 %v304, %v298
    %v479 = vpack.c.b16 %v305, %v299
    %v480 = vpack.c.b16 %v306, %v300
    %v481 = vpack.c.b16 %v307, %v301
    %v482 = vpack.c.b16 %v308, %v302
    %v483 = vpack.c.b16 %v309, %v303
    %v484 = vpack.c.b16 %v316, %v310
    %v485 = vpack.c.b16 %v317, %v311
    %v486 = vpack.c.b16 %v318, %v312
    %v487 = vpack.c.b16 %v319, %v313
    %v488 = vpack.c.b16 %v320, %v314
    %v489 = vpack.c.b16 %v321, %v315
    %v490 = vpack.c.b16 %v328, %v322
    %v491 = vpack.c.b16 %v329, %v323
    %v492 = vpack.c.b16 %v330, %v324
    %v493 = vpack.c.b16 %v331, %v325
    %v494 = vpack.c.b16 %v332, %v326
    %v495 = vpack.c.b16 %v333, %v327
    %v496 = vpack.c.b16 %v340, %v334
    %v497 = vpack.c.b16 %v341, %v335
    %v498 = vpack.c.b16 %v342, %v336
    %v499 = vpack.c.b16 %v343, %v337
    %v500 = vpack.c.b16 %v344, %v338
    %v501 = vpack.c.b16 %v345, %v339
    %v502 = vpack.c.b16 %v352, %v346
    %v503 = vpack.c.b16 %v353, %v347
    %v504 = vpack.c.b16 %v354, %v348
    %v505 = vpack.c.b16 %v355, %v349
    %v506 = vpack.c.b16 %v356, %v350
    %v507 = vpack.c.b16 %v357, %v351
    %v508 = vpack.c.b16 %v364, %v358
    %v509 = vpack.c.b16 %v365, %v359
    %v510 = vpack.c.b16 %v366, %v360
    %v511 = vpack.c.b16 %v367, %v361
    %v512 = vpack.c.b16 %v368, %v362
    %v513 = vpack.c.b16 %v369, %v363
    %v514 = vpack.c.b16 %v376, %v370
    %v515 = vpack.c.b16 %v377, %v371
    %v516 = vpack.c.b16 %v378, %v372
    %v517 = vpack.c.b16 %v379, %v373
    %v518 = vpack.c.b16 %v380, %v374
    %v519 = vpack.c.b16 %v381, %v375
    %v520 = vpack.c.b16 %v388, %v382
    %v521 = vpack.c.b16 %v389, %v383
    %v522 = vpack.c.b16 %v390, %v384
    %v523 = vpack.c.b16 %v391, %v385
    %v524 = vpack.c.b16 %v392, %v386
    %v525 = vpack.c.b16 %v393, %v387
    %v526 = vpack.c.b16 %v400, %v394
    %v527 = vpack.c.b16 %v401, %v395
    %v528 = vpack.c.b16 %v402, %v396
    %v529 = vpack.c.b16 %v403, %v397
    %v530 = vpack.c.b16 %v404, %v398
    %v531 = vpack.c.b16 %v405, %v399
    %v532 = vpack.c.b16 %v412, %v406
    %v533 = vpack.c.b16 %v413, %v407
    %v534 = vpack.c.b16 %v414, %v408
    %v535 = vpack.c.b16 %v415, %v409
    %v536 = vpack.c.b16 %v416, %v410
    %v537 = vpack.c.b16 %v417, %v411
    %v538 = vpack.c.b16 %v424, %v418
    %v539 = vpack.c.b16 %v425, %v419
    %v540 = vpack.c.b16 %v426, %v420
    %v541 = vpack.c.b16 %v427, %v421
    %v542 = vpack.c.b16 %v428, %v422
    %v543 = vpack.c.b16 %v429, %v423
    %v544 = vpack.c.b16 %v436, %v430
    %v545 = vpack.c.b16 %v437, %v431
    %v546 = vpack.c.b16 %v438, %v432
    %v547 = vpack.c.b16 %v439, %v433
    %v548 = vpack.c.b16 %v440, %v434
    %v549 = vpack.c.b16 %v441, %v435
    %v550 = vpack.c.b16 %v448, %v442
    %v551 = vpack.c.b16 %v449, %v443
    %v552 = vpack.c.b16 %v450, %v444
    %v553 = vpack.c.b16 %v451, %v445
    %v554 = vpack.c.b16 %v452, %v446
    %v555 = vpack.c.b16 %v453, %v447
    %v556 = vpack.c.b16 %v460, %v454
    %v557 = vpack.c.b16 %v461, %v455
    %v558 = vpack.c.b16 %v462, %v456
    %v559 = vpack.c.b16 %v463, %v457
    %v560 = vpack.c.b16 %v464, %v458
    %v561 = vpack.c.b16 %v465, %v459
    %658 = vmatpush.bf16.msra.mxu0 %v508
    %659 = vmatpush.bf16.msra.mxu0 %v502
    %660 = vmatpush.bf16.msra.mxu0 %v496
    %661 = vmatpush.bf16.msra.mxu0 %v490
    %662 = vmatpush.bf16.msra.mxu0 %v484
    %663 = vmatpush.bf16.msra.mxu0 %v478
    %664 = vmatpush.bf16.msra.mxu0 %v472
    %665 = vmatpush.bf16.msra.mxu0 %v466
    %666 = vmatmul.bf16.gmra.mxu0 %v66
    %v667 = vpop.f32.mrf.mxu0
    %v668 = vadd.f32 %v166, %v667
    %v669 = vpop.f32.mrf.mxu0
    %670 = vdwg.mxu0
    %671 = vmatpush.bf16.msra.mxu0 %v556
    %672 = vmatpush.bf16.msra.mxu0 %v550
    %673 = vmatpush.bf16.msra.mxu0 %v544
    %674 = vmatpush.bf16.msra.mxu0 %v538
    %675 = vmatpush.bf16.msra.mxu0 %v532
    %676 = vmatpush.bf16.msra.mxu0 %v526
    %677 = vmatpush.bf16.msra.mxu0 %v520
    %678 = vmatpush.bf16.msra.mxu0 %v514
    %679 = vmatmul.bf16.gmra.mxu0 %v67
    %v680 = vpop.f32.mrf.mxu0
    %v681 = vadd.f32 %v668, %v680
    %v682 = vpop.f32.mrf.mxu0
    %683 = vdwg.mxu0
    %684 = vmatpush.bf16.msra.mxu0 %v509
    %685 = vmatpush.bf16.msra.mxu0 %v503
    %686 = vmatpush.bf16.msra.mxu0 %v497
    %687 = vmatpush.bf16.msra.mxu0 %v491
    %688 = vmatpush.bf16.msra.mxu0 %v485
    %689 = vmatpush.bf16.msra.mxu0 %v479
    %690 = vmatpush.bf16.msra.mxu0 %v473
    %691 = vmatpush.bf16.msra.mxu0 %v467
    %692 = vmatmul.bf16.gmra.mxu0 %v66
    %v693 = vpop.f32.mrf.mxu0
    %v694 = vadd.f32 %v167, %v693
    %v695 = vpop.f32.mrf.mxu0
    %696 = vdwg.mxu0
    %697 = vmatpush.bf16.msra.mxu0 %v557
    %698 = vmatpush.bf16.msra.mxu0 %v551
    %699 = vmatpush.bf16.msra.mxu0 %v545
    %700 = vmatpush.bf16.msra.mxu0 %v539
    %701 = vmatpush.bf16.msra.mxu0 %v533
    %702 = vmatpush.bf16.msra.mxu0 %v527
    %703 = vmatpush.bf16.msra.mxu0 %v521
    %704 = vmatpush.bf16.msra.mxu0 %v515
    %705 = vmatmul.bf16.gmra.mxu0 %v67
    %v706 = vpop.f32.mrf.mxu0
    %v707 = vadd.f32 %v694, %v706
    %v708 = vpop.f32.mrf.mxu0
    %709 = vdwg.mxu0
    %710 = vmatpush.bf16.msra.mxu0 %v510
    %711 = vmatpush.bf16.msra.mxu0 %v504
    %712 = vmatpush.bf16.msra.mxu0 %v498
    %713 = vmatpush.bf16.msra.mxu0 %v492
    %714 = vmatpush.bf16.msra.mxu0 %v486
    %715 = vmatpush.bf16.msra.mxu0 %v480
    %716 = vmatpush.bf16.msra.mxu0 %v474
    %717 = vmatpush.bf16.msra.mxu0 %v468
    %718 = vmatmul.bf16.gmra.mxu0 %v66
    %v719 = vpop.f32.mrf.mxu0
    %v720 = vadd.f32 %v168, %v719
    %v721 = vpop.f32.mrf.mxu0
    %722 = vdwg.mxu0
    %723 = vmatpush.bf16.msra.mxu0 %v558
    %724 = vmatpush.bf16.msra.mxu0 %v552
    %725 = vmatpush.bf16.msra.mxu0 %v546
    %726 = vmatpush.bf16.msra.mxu0 %v540
    %727 = vmatpush.bf16.msra.mxu0 %v534
    %728 = vmatpush.bf16.msra.mxu0 %v528
    %729 = vmatpush.bf16.msra.mxu0 %v522
    %730 = vmatpush.bf16.msra.mxu0 %v516
    %731 = vmatmul.bf16.gmra.mxu0 %v67
    %v732 = vpop.f32.mrf.mxu0
    %v733 = vadd.f32 %v720, %v732
    %v734 = vpop.f32.mrf.mxu0
    %735 = vdwg.mxu0
    %736 = vmatpush.bf16.msra.mxu0 %v511
    %737 = vmatpush.bf16.msra.mxu0 %v505
    %738 = vmatpush.bf16.msra.mxu0 %v499
    %739 = vmatpush.bf16.msra.mxu0 %v493
    %740 = vmatpush.bf16.msra.mxu0 %v487
    %741 = vmatpush.bf16.msra.mxu0 %v481
    %742 = vmatpush.bf16.msra.mxu0 %v475
    %743 = vmatpush.bf16.msra.mxu0 %v469
    %744 = vmatmul.bf16.gmra.mxu0 %v66
    %v745 = vpop.f32.mrf.mxu0
    %v746 = vadd.f32 %v169, %v745
    %v747 = vpop.f32.mrf.mxu0
    %748 = vdwg.mxu0
    %749 = vmatpush.bf16.msra.mxu0 %v559
    %750 = vmatpush.bf16.msra.mxu0 %v553
    %751 = vmatpush.bf16.msra.mxu0 %v547
    %752 = vmatpush.bf16.msra.mxu0 %v541
    %753 = vmatpush.bf16.msra.mxu0 %v535
    %754 = vmatpush.bf16.msra.mxu0 %v529
    %755 = vmatpush.bf16.msra.mxu0 %v523
    %756 = vmatpush.bf16.msra.mxu0 %v517
    %757 = vmatmul.bf16.gmra.mxu0 %v67
    %v758 = vpop.f32.mrf.mxu0
    %v759 = vadd.f32 %v746, %v758
    %v760 = vpop.f32.mrf.mxu0
    %761 = vdwg.mxu0
    %762 = vmatpush.bf16.msra.mxu0 %v512
    %763 = vmatpush.bf16.msra.mxu0 %v506
    %764 = vmatpush.bf16.msra.mxu0 %v500
    %765 = vmatpush.bf16.msra.mxu0 %v494
    %766 = vmatpush.bf16.msra.mxu0 %v488
    %767 = vmatpush.bf16.msra.mxu0 %v482
    %768 = vmatpush.bf16.msra.mxu0 %v476
    %769 = vmatpush.bf16.msra.mxu0 %v470
    %770 = vmatmul.bf16.gmra.mxu0 %v66
    %v771 = vpop.f32.mrf.mxu0
    %v772 = vadd.f32 %v170, %v771
    %v773 = vpop.f32.mrf.mxu0
    %774 = vdwg.mxu0
    %775 = vmatpush.bf16.msra.mxu0 %v560
    %776 = vmatpush.bf16.msra.mxu0 %v554
    %777 = vmatpush.bf16.msra.mxu0 %v548
    %778 = vmatpush.bf16.msra.mxu0 %v542
    %779 = vmatpush.bf16.msra.mxu0 %v536
    %780 = vmatpush.bf16.msra.mxu0 %v530
    %781 = vmatpush.bf16.msra.mxu0 %v524
    %782 = vmatpush.bf16.msra.mxu0 %v518
    %783 = vmatmul.bf16.gmra.mxu0 %v67
    %v784 = vpop.f32.mrf.mxu0
    %v785 = vadd.f32 %v772, %v784
    %v786 = vpop.f32.mrf.mxu0
    %787 = vdwg.mxu0
    %788 = vmatpush.bf16.msra.mxu0 %v513
    %789 = vmatpush.bf16.msra.mxu0 %v507
    %790 = vmatpush.bf16.msra.mxu0 %v501
    %791 = vmatpush.bf16.msra.mxu0 %v495
    %792 = vmatpush.bf16.msra.mxu0 %v489
    %793 = vmatpush.bf16.msra.mxu0 %v483
    %794 = vmatpush.bf16.msra.mxu0 %v477
    %795 = vmatpush.bf16.msra.mxu0 %v471
    %796 = vmatmul.bf16.gmra.mxu0 %v66
    %v797 = vpop.f32.mrf.mxu0
    %v798 = vadd.f32 %v171, %v797
    %v799 = vpop.f32.mrf.mxu0
    %800 = vdwg.mxu0
    %801 = vmatpush.bf16.msra.mxu0 %v561
    %802 = vmatpush.bf16.msra.mxu0 %v555
    %803 = vmatpush.bf16.msra.mxu0 %v549
    %804 = vmatpush.bf16.msra.mxu0 %v543
    %805 = vmatpush.bf16.msra.mxu0 %v537
    %806 = vmatpush.bf16.msra.mxu0 %v531
    %807 = vmatpush.bf16.msra.mxu0 %v525
    %808 = vmatpush.bf16.msra.mxu0 %v519
    %809 = vmatmul.bf16.gmra.mxu0 %v67
    %v810 = vpop.f32.mrf.mxu0
    %v811 = vadd.f32 %v798, %v810
    %v812 = vpop.f32.mrf.mxu0
    %813 = vdwg.mxu0
    %v814 = vadd.f32 %v681, %v759
    %v815 = vxor.u32 %v814, 2147483648
    %v816 = vmul.f32 %v815, 1.442695
    %v817 = vpow.pop %v816
    %v818 = vadd.f32 %v817, 1.0
    %v819 = vrcp.pop %v818
    %v820 = vmul.f32 %v818, %v819
    %v821 = vsub.f32 1.0, %v820
    %v822 = vmul.f32 %v819, %v821
    %v823 = vadd.f32 %v819, %v822
    %vm824 = vweird.f32 %v818
    %vm825 = vweird.f32 %v819
    %vm826 = vmor %vm824, %vm825
    %v827 = vsel %vm826, %v819, %v823
    %v828 = vand.u32 2147483647, %v818
    %vm829 = vcmp.eq.f32.partialorder %v828, 8.507059e+37
    %v830 = vand.u32 %v818, 2147483648
    %v831 = vor.u32 1.1754944e-38, %v830
    %v832 = vsel %vm829, %v831, %v827
    %v833 = vmul.f32 1.0, %v832
    %v834 = vadd.f32 %v707, %v785
    %v835 = vxor.u32 %v834, 2147483648
    %v836 = vmul.f32 %v835, 1.442695
    %v837 = vpow.pop %v836
    %v838 = vadd.f32 %v837, 1.0
    %v839 = vrcp.pop %v838
    %v840 = vmul.f32 %v838, %v839
    %v841 = vsub.f32 1.0, %v840
    %v842 = vmul.f32 %v839, %v841
    %v843 = vadd.f32 %v839, %v842
    %vm844 = vweird.f32 %v838
    %vm845 = vweird.f32 %v839
    %vm846 = vmor %vm844, %vm845
    %v847 = vsel %vm846, %v839, %v843
    %v848 = vand.u32 2147483647, %v838
    %vm849 = vcmp.eq.f32.partialorder %v848, 8.507059e+37
    %v850 = vand.u32 %v838, 2147483648
    %v851 = vor.u32 1.1754944e-38, %v850
    %v852 = vsel %vm849, %v851, %v847
    %v853 = vmul.f32 1.0, %v852
    %v854 = vmul.f32 %v833, %v811
    %v855 = vadd.f32 %v733, %v854
    %v856 = vtanh.pop %v855
    %v857 = vsub.f32 1.0, %v853
    %v858 = vmul.f32 %v857, %v856
    %v859 = vmul.f32 %v853, %v65
    %v860 = vadd.f32 %v858, %v859
    %v861 = vpack.c.bf16 %v860, %v860
    %v862 = vld [vmem:[#allocation6] sm:$0xf]
    %v863 = vld [vmem:[#allocation6 + $0x4] sm:$0xf]
    %v864 = vld [vmem:[#allocation6 + $0x8] sm:$0xf]
    %v865 = vld [vmem:[#allocation6 + $0xc] sm:$0xf]
    %v866 = vld [vmem:[#allocation6 + $0x10] sm:$0xf]
    %v867 = vld [vmem:[#allocation6 + $0x14] sm:$0xf]
    %v868 = vld [vmem:[#allocation6 + $0x18] sm:$0xf]
    %v869 = vld [vmem:[#allocation6 + $0x1c] sm:$0xf]
    %v870 = vld [vmem:[#allocation6 + $0x20] sm:$0xf]
    %v871 = vld [vmem:[#allocation6 + $0x24] sm:$0xf]
    %v872 = vld [vmem:[#allocation6 + $0x28] sm:$0xf]
    %v873 = vld [vmem:[#allocation6 + $0x2c] sm:$0xf]
    %v874 = vld [vmem:[#allocation6 + $0x30] sm:$0xf]
    %v875 = vld [vmem:[#allocation6 + $0x34] sm:$0xf]
    %v876 = vld [vmem:[#allocation6 + $0x38] sm:$0xf]
    %v877 = vld [vmem:[#allocation6 + $0x3c] sm:$0xf]
    %v894 = vunpack.c.l.b16 %v862
    %v895 = vunpack.c.l.b16 %v863
    %v896 = vunpack.c.l.b16 %v864
    %v897 = vunpack.c.l.b16 %v865
    %v898 = vunpack.c.l.b16 %v866
    %v899 = vunpack.c.l.b16 %v867
    %v900 = vunpack.c.l.b16 %v868
    %v901 = vunpack.c.l.b16 %v869
    %v902 = vunpack.c.l.b16 %v870
    %v903 = vunpack.c.l.b16 %v871
    %v904 = vunpack.c.l.b16 %v872
    %v905 = vunpack.c.l.b16 %v873
    %v906 = vunpack.c.l.b16 %v874
    %v907 = vunpack.c.l.b16 %v875
    %v908 = vunpack.c.l.b16 %v876
    %v909 = vunpack.c.l.b16 %v877
    %v910 = vpack.c.b16 %v895, %v894
    %v911 = vpack.c.b16 %v897, %v896
    %v912 = vpack.c.b16 %v899, %v898
    %v913 = vpack.c.b16 %v901, %v900
    %v914 = vpack.c.b16 %v903, %v902
    %v915 = vpack.c.b16 %v905, %v904
    %v916 = vpack.c.b16 %v907, %v906
    %v917 = vpack.c.b16 %v909, %v908
    %926 = vmatpush.bf16.msra.mxu0 %v917
    %927 = vmatpush.bf16.msra.mxu0 %v916
    %928 = vmatpush.bf16.msra.mxu0 %v915
    %929 = vmatpush.bf16.msra.mxu0 %v914
    %930 = vmatpush.bf16.msra.mxu0 %v913
    %931 = vmatpush.bf16.msra.mxu0 %v912
    %932 = vmatpush.bf16.msra.mxu0 %v911
    %933 = vmatpush.bf16.msra.mxu0 %v910
    %934 = vmatmul.bf16.gmra.mxu0 %v861
    %v935 = vpop.f32.mrf.mxu0
    %v936 = vadd.f32 0.0, %v935
    %v937 = vpop.f32.mrf.mxu0
    %938 = vdwg.mxu0
    %v939 = vadd.f32 %v64, %v936
    %v940 = vld [vmem:[%s5] sm:$0x1]
    %v942 = vperm.slane %v940, 0
    %v944 = vadd.f32 %v939, %v942
    %945 = vst [vmem:[#allocation2] sm:$0xff] %v860
    %946 = vst [vmem:[%s7] sm:$0xff] %v860
    %947 = vst [vmem:[#allocation8] sm:$0xff] %v944
    // Predicated region
    $region38: #{_decode_impl.1} parent=1 // pred_check
      _
    $region39: #{_decode_impl.1} parent=1 // pred_check_branch
      %949 = sbr.rel (0) target = $region41
    $region40: #{_decode_impl.1} parent=1 // pred_region
      %951 = vsyncadd [#allocation5], 0
      %s953 = sshll.u32 [#allocation8], 4
      %s954 = int_to_ptr.vmem [resolvable:$true] %s953
      %s955 = sshll.u32 %s6, 4
      %s956 = int_to_ptr.hbm [resolvable:$true] %s955
      %958 = dma.vmem_to_hbm [thread:$0]  %s954, 128, %s956, [#allocation5]
    $region41: #{_decode_impl.1} parent=1 // pred_fallthru
      _
    // Predicated region
    $region42: #{_decode_impl.1} parent=1 // pred_check
      _
    $region43: #{_decode_impl.1} parent=1 // pred_check_branch
      %960 = sbr.rel (0) target = $region45
    $region44: #{_decode_impl.1} parent=1 // pred_region
      _
    $region45: #{_decode_impl.1} parent=1 // pred_fallthru
      _
    // Predicated region
    $region46: #{_decode_impl.1} parent=1 // pred_check
      _
    $region47: #{_decode_impl.1} parent=1 // pred_check_branch
      %962 = sbr.rel (0) target = $region49
    $region48: #{_decode_impl.1} parent=1 // pred_region
      %964 = dma.done [#allocation5], 128
    $region49: #{_decode_impl.1} parent=1 // pred_fallthru
      _
    // Predicated region
    $region50: #{_decode_impl.1} parent=1 // pred_check
      _
    $region51: #{_decode_impl.1} parent=1 // pred_check_branch
      %966 = sbr.rel (0) target = $region53
    $region52: #{_decode_impl.1} parent=1 // pred_region
      _
    $region53: #{_decode_impl.1} parent=1 // pred_fallthru
      _
    %967 = vsyncpa [#allocation4], 1
    %968 = vsyncpa [#allocation7], 1
    %969 = vsyncpa [#allocation5], 1

</llo_original>
